<compile_context>
chip_gen: v5e
topology: v5e:2x2
jax: 0.10.0
libtpu: 0.0.40
codegen_flags: <defaults>
</compile_context>

<pallas_src>
import math

import jax
import jax.numpy as jnp
from jax.experimental import pallas as pl
from jax.experimental.pallas import tpu as pltpu


# ----------------------------------------------------------------------------- kernel

def _ffn_kernel(x_ref, w1t_ref, b1_ref, w2t_ref, b2_ref, o_ref):
    """One (TM, H) tile of tokens: y = relu(x @ W1^T + b1) @ W2^T + b2."""
    # MXU operands in the weights' dtype (bf16 by default), f32 accumulation.
    x = x_ref[...].astype(w1t_ref.dtype)                          # (TM, H)
    h = jnp.dot(x, w1t_ref[...], preferred_element_type=jnp.float32)
    h = jnp.maximum(h + b1_ref[...], 0.0)                         # (TM, FF) f32 (VPU)
    # TODO(synk): training-mode dropout would go here (pltpu.prng_*); eval mode = identity.
    y = jnp.dot(h.astype(w2t_ref.dtype), w2t_ref[...],
                preferred_element_type=jnp.float32)
    o_ref[...] = (y + b2_ref[...]).astype(o_ref.dtype)            # (TM, H)


# ----------------------------------------------------------------------------- helpers

def prepare_ffn_params(raw, compute_dtype=jnp.bfloat16):
    """One-time parameter prep (do at model-load time, NOT per forward).

    raw: PyTorch nn.Linear layout {w1:(FF,H), b1:(FF,), w2:(H,FF), b2:(H,)}.
    Returns pre-transposed (in, out) weights cast to compute_dtype and f32 biases.
    """
    w_dtype = compute_dtype if compute_dtype is not None else jnp.asarray(raw["w1"]).dtype
    return {
        "w1t": jnp.asarray(raw["w1"]).T.astype(w_dtype),            # (H, FF)
        "b1": jnp.asarray(raw["b1"]).reshape(1, -1).astype(jnp.float32),
        "w2t": jnp.asarray(raw["w2"]).T.astype(w_dtype),            # (FF, H)
        "b2": jnp.asarray(raw["b2"]).reshape(1, -1).astype(jnp.float32),
    }


def _choose_tm(M, block_rows):
    """Pick the M-tile size: >=2 tiles when possible (megacore / pipeline overlap),
    minimal padding (ideally a divisor of M), MXU/bf16-friendly row counts, then size."""
    ALIGN = 8  # sublane granularity for the f32 x / out tiles
    cap = max(ALIGN, (min(block_rows, M) // ALIGN) * ALIGN)
    best_key, best_t = None, cap
    t = cap
    while t >= ALIGN:
        n_tiles = pl.cdiv(M, t)
        pad = n_tiles * t - M
        key = (
            0 if (n_tiles >= 2 or M <= ALIGN) else 1,            # want >= 2 parallel tiles
            pad,                                                 # avoid padded copy of x
            0 if t % 256 == 0 else (1 if t % 16 == 0 else 2),    # MXU / bf16-friendly rows
            -t,                                                  # amortize per-step overhead
        )
        if best_key is None or key < best_key:
            best_key, best_t = key, t
        t -= ALIGN
    return best_t


def _vmem_limit_bytes(tm, H, FF, x_dtype, w_dtype, out_dtype):
    """Footprint-based VMEM request, capped per-generation (never the full physical VMEM)."""
    bx = jnp.dtype(x_dtype).itemsize
    bw = jnp.dtype(w_dtype).itemsize
    bo = jnp.dtype(out_dtype).itemsize
    need = (
        2 * tm * H * bx            # double-buffered x tile
        + 2 * tm * H * bo          # double-buffered out tile
        + 2 * H * FF * bw          # resident W1^T + W2^T (single-buffered)
        + (FF + H) * 4 * 8         # biases (padded-sublane estimate)
        + tm * FF * 4              # (tm, FF) f32 hidden activation
        + tm * FF * bw             # narrowed copy fed to the second matmul
    )
    limit = 2 * need + (8 << 20)   # headroom for compiler scratch / spills
    try:
        cap = (int(pltpu.get_tpu_info().vmem_capacity_bytes) * 3) // 4  # ~48 MiB v7x, ~96 MiB v5e/v6e
    except Exception:
        cap = 48 << 20
    return int(min(max(limit, 16 << 20), cap))


# ----------------------------------------------------------------------------- wrapper

def ffn_pallas(x, prepared, *, block_rows=512):
    """x: [B, S, H].  prepared: output of prepare_ffn_params().  Returns [B, S, H] in x.dtype."""
    B, S, H = x.shape
    w1t, b1, w2t, b2 = prepared["w1t"], prepared["b1"], prepared["w2t"], prepared["b2"]
    FF = w1t.shape[1]
    assert w1t.shape == (H, FF) and w2t.shape == (FF, H)
    out_dtype = x.dtype

    # FFN is position-wise: flatten tokens, rows are independent.
    M = B * S
    x2 = x.reshape(M, H)

    tm = _choose_tm(M, block_rows)
    n_tiles = pl.cdiv(M, tm)
    m_pad = n_tiles * tm
    if m_pad != M:
        # Fallback only: _choose_tm prefers tiles that divide M so this copy is normally avoided.
        x2 = jnp.pad(x2, ((0, m_pad - M), (0, 0)))

    w_bytes = jnp.dtype(w1t.dtype).itemsize
    cost = pl.CostEstimate(
        flops=4 * M * H * FF,                    # two matmuls: 2*M*H*FF each
        transcendentals=0,
        bytes_accessed=(M * H * (jnp.dtype(x.dtype).itemsize + jnp.dtype(out_dtype).itemsize)
                        + 2 * H * FF * w_bytes + (FF + H) * 4),
    )

    out = pl.pallas_call(
        _ffn_kernel,
        out_shape=jax.ShapeDtypeStruct((m_pad, H), out_dtype),
        grid_spec=pltpu.PrefetchScalarGridSpec(
            num_scalar_prefetch=0,
            grid=(n_tiles,),
            in_specs=[
                # x tile: pipelined (double-buffered by default).
                pl.BlockSpec((tm, H), lambda i: (i, 0)),
                # Grid-invariant weights / biases: single-buffered VMEM residents.
                pl.BlockSpec((H, FF), lambda i: (0, 0), pipeline_mode=pl.Buffered(1)),
                pl.BlockSpec((1, FF), lambda i: (0, 0), pipeline_mode=pl.Buffered(1)),
                pl.BlockSpec((FF, H), lambda i: (0, 0), pipeline_mode=pl.Buffered(1)),
                pl.BlockSpec((1, H), lambda i: (0, 0), pipeline_mode=pl.Buffered(1)),
            ],
            out_specs=pl.BlockSpec((tm, H), lambda i: (i, 0)),
        ),
        compiler_params=pltpu.CompilerParams(
            dimension_semantics=("parallel",),
            vmem_limit_bytes=_vmem_limit_bytes(tm, H, FF, x.dtype, w1t.dtype, out_dtype),
        ),
        cost_estimate=cost,
    )(x2, w1t, b1, w2t, b2)

    if m_pad != M:
        out = out[:M]
    return out.reshape(B, S, H)


def ffn_reference(x, raw):
    """Pure-JAX reference mirroring the PyTorch forward (eval mode, f32)."""
    h = jnp.maximum(x @ raw["w1"].T + raw["b1"], 0.0)
    return h @ raw["w2"].T + raw["b2"]


# ----------------------------------------------------------------------------- demo

if __name__ == "__main__":
    # Shapes implied by the module: HIDDEN_SIZE=32, FF_SIZE=128, batch=2, seq=8.
    B, S, H, FF = 2, 8, 32, 128

    key = jax.random.PRNGKey(0)
    keys = jax.random.split(key, 5)

    s1 = 1.0 / math.sqrt(H)
    s2 = 1.0 / math.sqrt(FF)
    raw = {
        "w1": jax.random.uniform(keys[0], (FF, H), jnp.float32, -s1, s1),   # nn.Linear(H, FF)
        "b1": jax.random.uniform(keys[1], (FF,), jnp.float32, -s1, s1),
        "w2": jax.random.uniform(keys[2], (H, FF), jnp.float32, -s2, s2),   # nn.Linear(FF, H)
        "b2": jax.random.uniform(keys[3], (H,), jnp.float32, -s2, s2),
    }

    x = jax.random.normal(keys[4], (B, S, H), jnp.float32)
    ref = ffn_reference(x, raw)

    # f32-operand path: tight numerical check against the reference.
    params_f32 = prepare_ffn_params(raw, compute_dtype=None)
    out_f32 = jax.block_until_ready(ffn_pallas(x, params_f32))
    assert out_f32.shape == (B, S, H)
    assert jnp.allclose(out_f32, ref, atol=1e-4, rtol=1e-4), "f32 path mismatch vs reference"

    # Default bf16-operand path (f32 accumulation): looser tolerance vs the f32 reference.
    params_bf16 = prepare_ffn_params(raw)  # bf16 weights (prepared once, reused every call)
    out_bf16 = jax.block_until_ready(ffn_pallas(x, params_bf16))
    assert out_bf16.shape == (B, S, H)
    assert jnp.allclose(out_bf16, ref, atol=1e-1, rtol=1e-1), "bf16 path mismatch vs reference"

    print("KERNEL_OK")
</pallas_src>

<mosaic_0001>
module attributes {stable_mosaic.version = 11 : i64} {
  func.func @_ffn_kernel(%arg0: i32, %arg1: memref<8x32xf32, #tpu.memory_space<vmem>>, %arg2: memref<32x128xf32, #tpu.memory_space<vmem>>, %arg3: memref<1x128xf32, #tpu.memory_space<vmem>>, %arg4: memref<128x32xf32, #tpu.memory_space<vmem>>, %arg5: memref<1x32xf32, #tpu.memory_space<vmem>>, %arg6: memref<8x32xf32, #tpu.memory_space<vmem>>) attributes {dimension_semantics = [#tpu.dimension_semantics<parallel>], iteration_bounds = array<i64: 2>, scalar_prefetch = 0 : i64, scratch_operands = 0 : i64, tpu.core_type = #tpu.core_type<tc>, window_params = [{transform_indices = @transform_0, window_bounds = array<i64: 8, 32>}, {pipeline_mode = #tpu.pipeline_mode<synchronous>, transform_indices = @transform_1, window_bounds = array<i64: 32, 128>}, {pipeline_mode = #tpu.pipeline_mode<synchronous>, transform_indices = @transform_2, window_bounds = array<i64: 1, 128>}, {pipeline_mode = #tpu.pipeline_mode<synchronous>, transform_indices = @transform_3, window_bounds = array<i64: 128, 32>}, {pipeline_mode = #tpu.pipeline_mode<synchronous>, transform_indices = @transform_4, window_bounds = array<i64: 1, 32>}, {transform_indices = @transform_5, window_bounds = array<i64: 8, 32>}]} {
    %c0 = arith.constant 0 : index
    %c0_0 = arith.constant 0 : index
    %0 = vector.load %arg1[%c0, %c0_0] : memref<8x32xf32, #tpu.memory_space<vmem>>, vector<8x32xf32>
    %c0_1 = arith.constant 0 : index
    %c0_2 = arith.constant 0 : index
    %1 = vector.load %arg2[%c0_1, %c0_2] : memref<32x128xf32, #tpu.memory_space<vmem>>, vector<32x128xf32>
    %cst = arith.constant dense<0.000000e+00> : vector<8x128xf32>
    %2 = tpu.matmul %0, %1, %cst {dimension_numbers = #tpu.dot_dimension_numbers<[1], [0], [0], [1], [0, 0, 1, 1], [], []>} : vector<8x32xf32>, vector<32x128xf32>, vector<8x128xf32> -> vector<8x128xf32>
    %c0_3 = arith.constant 0 : index
    %c0_4 = arith.constant 0 : index
    %3 = vector.load %arg3[%c0_3, %c0_4] : memref<1x128xf32, #tpu.memory_space<vmem>>, vector<1x128xf32>
    %4 = vector.broadcast %3 : vector<1x128xf32> to vector<8x128xf32>
    %5 = arith.addf %2, %4 : vector<8x128xf32>
    %cst_5 = arith.constant 0.000000e+00 : f32
    %6 = vector.broadcast %cst_5 : f32 to vector<8x128xf32>
    %7 = arith.maximumf %5, %6 : vector<8x128xf32>
    %c0_6 = arith.constant 0 : index
    %c0_7 = arith.constant 0 : index
    %8 = vector.load %arg4[%c0_6, %c0_7] : memref<128x32xf32, #tpu.memory_space<vmem>>, vector<128x32xf32>
    %cst_8 = arith.constant dense<0.000000e+00> : vector<8x32xf32>
    %9 = tpu.matmul %7, %8, %cst_8 {dimension_numbers = #tpu.dot_dimension_numbers<[1], [0], [0], [1], [0, 0, 1, 1], [], []>} : vector<8x128xf32>, vector<128x32xf32>, vector<8x32xf32> -> vector<8x32xf32>
    %c0_9 = arith.constant 0 : index
    %c0_10 = arith.constant 0 : index
    %10 = vector.load %arg5[%c0_9, %c0_10] : memref<1x32xf32, #tpu.memory_space<vmem>>, vector<1x32xf32>
    %11 = vector.broadcast %10 : vector<1x32xf32> to vector<8x32xf32>
    %12 = arith.addf %9, %11 : vector<8x32xf32>
    %c0_11 = arith.constant 0 : index
    %c0_12 = arith.constant 0 : index
    %13 = vector.load %arg6[%c0_11, %c0_12] : memref<8x32xf32, #tpu.memory_space<vmem>>, vector<8x32xf32>
    tpu.vector_store %arg6[%c0_11, %c0_12], %12 {strides = array<i32>} : memref<8x32xf32, #tpu.memory_space<vmem>>, vector<8x32xf32>,
    return
  }
  func.func @transform_0(%arg0: i32) -> (i32, i32) {
    %c0_i32 = arith.constant 0 : i32
    %c0_i32_0 = arith.constant 0 : i32
    return %arg0, %c0_i32 : i32, i32
  }
  func.func @transform_1(%arg0: i32) -> (i32, i32) {
    %c0_i32 = arith.constant 0 : i32
    %c0_i32_0 = arith.constant 0 : i32
    %c0_i32_1 = arith.constant 0 : i32
    return %c0_i32, %c0_i32_0 : i32, i32
  }
  func.func @transform_2(%arg0: i32) -> (i32, i32) {
    %c0_i32 = arith.constant 0 : i32
    %c0_i32_0 = arith.constant 0 : i32
    %c0_i32_1 = arith.constant 0 : i32
    return %c0_i32, %c0_i32_0 : i32, i32
  }
  func.func @transform_3(%arg0: i32) -> (i32, i32) {
    %c0_i32 = arith.constant 0 : i32
    %c0_i32_0 = arith.constant 0 : i32
    %c0_i32_1 = arith.constant 0 : i32
    return %c0_i32, %c0_i32_0 : i32, i32
  }
  func.func @transform_4(%arg0: i32) -> (i32, i32) {
    %c0_i32 = arith.constant 0 : i32
    %c0_i32_0 = arith.constant 0 : i32
    %c0_i32_1 = arith.constant 0 : i32
    return %c0_i32, %c0_i32_0 : i32, i32
  }
  func.func @transform_5(%arg0: i32) -> (i32, i32) {
    %c0_i32 = arith.constant 0 : i32
    %c0_i32_0 = arith.constant 0 : i32
    return %arg0, %c0_i32 : i32, i32
  }
}

</mosaic_0001>

<llo_original>
// kernel: tpu_custom_call.1
$region0: #{tpu_custom_call.1}
  #allocation0 [shape = 'u32[]', space=smem, size = 0x4, offset = 0x4, fixed_abs, tag = 'smem constant byte address 0x4 - core index']
  #allocation1 [shape = 'u32[72,128]{1,0:T(1,128)}', space=vmem, size = 0x9000, scoped, tag = 'internal scratch']
  %s0 = inlined_call_operand.vmem [shape: f32[16,32], index: 0, kind: input, shape index: {}]
  %s1 = inlined_call_operand.vmem [shape: f32[32,128], index: 1, kind: input, shape index: {}]
  %s2 = inlined_call_operand.vmem [shape: f32[1,128], index: 2, kind: input, shape index: {}]
  %s3 = inlined_call_operand.vmem [shape: f32[128,32], index: 3, kind: input, shape index: {}]
  %s4 = inlined_call_operand.vmem [shape: f32[1,32], index: 4, kind: input, shape index: {}]
  %s5 = inlined_call_operand.hbm [shape: f32[16,32], index: 5, kind: output, shape index: {}]
  %s6 = sld [smem:[#allocation0]]
  $region53: #{tpu_custom_call.1} parent=0
    _
  %s8 = ssub.s32 1, %s6
  %s9 = scalar_select 0, %s8, %s6
  $region1: #{tpu_custom_call.1} parent=0
    #allocation2 [shape = 'u8[8192]{0}', space=vmem, size = 0x2000, scoped, tag = 'output window, operand 0']
    #allocation3 [shape = 's32[2]{0}', space=sflag, size = 0x8, scoped, tag = 'scoped memory for tpu_custom_call.1']
    %10 = vsyncpa [#allocation3], 0
    %s11 = scalar_lea.sflag [#allocation3], 1
    %12 = vsyncpa %s11, 0
    loop: start=0, step=1, limit=4
    $region2: #{tpu_custom_call.1} parent=1 // loop_pre_header
      _
    $region3: #{tpu_custom_call.1} parent=1 // loop_header
      %s14 = sphi 0, %s18
      %p15 = scmp.ge.s32.totalorder %s14, 4
      %s24 = sphi 0, %s26
      %s27 = sphi 0, %s24
      %s28 = sphi 0, %s27
      %s44 = sphi 0, %s28
      %s48 = sphi 0, %s48
      %s50 = sphi 0, %s48
      %s51 = sphi 0, %s50
      %s65 = sphi 0, %s51
      %s69 = sphi 0, %s69
      %s71 = sphi 0, %s69
      %s72 = sphi 0, %s71
      %s86 = sphi 0, %s72
      %s90 = sphi 0, %s90
      %s92 = sphi 0, %s90
      %s93 = sphi 0, %s92
      %s107 = sphi 0, %s93
      %s111 = sphi 0, %s111
      %s113 = sphi 0, %s111
      %s114 = sphi 0, %s113
      %s128 = sphi 0, %s114
      %s134 = sphi 0, %s136
      %s137 = sphi 0, %s134
      %s138 = sphi 0, %s137
      %s154 = sphi 0, %s138
    $region4: #{tpu_custom_call.1} parent=1 // loop_header_branch
      %17 = sbr.rel (%p15) target = $region8
    $region5: #{tpu_custom_call.1} parent=1 // loop_body
      %s19 = ssub.s32 %s14, 1
      %s20 = ssub.s32 %s14, 2
      %s21 = sadd.s32 %s14, 1
      %s22 = ssub.s32 %s14, %s21
      %p23 = scmp.eq.s32.totalorder %s22, 0
      %s25 = sadd.s32 %s24, 1
      %s26 = scalar_select %p23, %s24, %s25
      %p29 = pneg %p23
      %p30 = scmp.eq.s32.totalorder %s14, 1
      %p31 = por %p29, %p30
      %p32 = scmp.ne.s32.totalorder %s24, %s27
      %p33 = scmp.eq.s32.totalorder %s14, 0
      %p34 = por %p32, %p33
      %p35 = scmp.ne.s32.totalorder %s24, %s27
      %p36 = scmp.eq.s32.totalorder %s19, 1
      %p37 = por %p35, %p36
      %p38 = scmp.ne.s32.totalorder %s27, %s28
      %p39 = scmp.eq.s32.totalorder %s19, 0
      %p40 = por %p38, %p39
      %p41 = scmp.ne.s32.totalorder %s27, %s28
      %p42 = scmp.eq.s32.totalorder %s20, 1
      %p43 = por %p41, %p42
      %p45 = scmp.ne.s32.totalorder %s28, %s44
      %p46 = scmp.eq.s32.totalorder %s20, 0
      %p47 = por %p45, %p46
      %s49 = sadd.s32 %s48, 1
      %p52 = scmp.eq.s32.totalorder %s14, 1
      %p53 = scmp.ne.s32.totalorder %s48, %s50
      %p54 = scmp.eq.s32.totalorder %s14, 0
      %p55 = por %p53, %p54
      %p56 = scmp.ne.s32.totalorder %s48, %s50
      %p57 = scmp.eq.s32.totalorder %s19, 1
      %p58 = por %p56, %p57
      %p59 = scmp.ne.s32.totalorder %s50, %s51
      %p60 = scmp.eq.s32.totalorder %s19, 0
      %p61 = por %p59, %p60
      %p62 = scmp.ne.s32.totalorder %s50, %s51
      %p63 = scmp.eq.s32.totalorder %s20, 1
      %p64 = por %p62, %p63
      %p66 = scmp.ne.s32.totalorder %s51, %s65
      %p67 = scmp.eq.s32.totalorder %s20, 0
      %p68 = por %p66, %p67
      %s70 = sadd.s32 %s69, 1
      %p73 = scmp.eq.s32.totalorder %s14, 1
      %p74 = scmp.ne.s32.totalorder %s69, %s71
      %p75 = scmp.eq.s32.totalorder %s14, 0
      %p76 = por %p74, %p75
      %p77 = scmp.ne.s32.totalorder %s69, %s71
      %p78 = scmp.eq.s32.totalorder %s19, 1
      %p79 = por %p77, %p78
      %p80 = scmp.ne.s32.totalorder %s71, %s72
      %p81 = scmp.eq.s32.totalorder %s19, 0
      %p82 = por %p80, %p81
      %p83 = scmp.ne.s32.totalorder %s71, %s72
      %p84 = scmp.eq.s32.totalorder %s20, 1
      %p85 = por %p83, %p84
      %p87 = scmp.ne.s32.totalorder %s72, %s86
      %p88 = scmp.eq.s32.totalorder %s20, 0
      %p89 = por %p87, %p88
      %s91 = sadd.s32 %s90, 1
      %p94 = scmp.eq.s32.totalorder %s14, 1
      %p95 = scmp.ne.s32.totalorder %s90, %s92
      %p96 = scmp.eq.s32.totalorder %s14, 0
      %p97 = por %p95, %p96
      %p98 = scmp.ne.s32.totalorder %s90, %s92
      %p99 = scmp.eq.s32.totalorder %s19, 1
      %p100 = por %p98, %p99
      %p101 = scmp.ne.s32.totalorder %s92, %s93
      %p102 = scmp.eq.s32.totalorder %s19, 0
      %p103 = por %p101, %p102
      %p104 = scmp.ne.s32.totalorder %s92, %s93
      %p105 = scmp.eq.s32.totalorder %s20, 1
      %p106 = por %p104, %p105
      %p108 = scmp.ne.s32.totalorder %s93, %s107
      %p109 = scmp.eq.s32.totalorder %s20, 0
      %p110 = por %p108, %p109
      %s112 = sadd.s32 %s111, 1
      %p115 = scmp.eq.s32.totalorder %s14, 1
      %p116 = scmp.ne.s32.totalorder %s111, %s113
      %p117 = scmp.eq.s32.totalorder %s14, 0
      %p118 = por %p116, %p117
      %p119 = scmp.ne.s32.totalorder %s111, %s113
      %p120 = scmp.eq.s32.totalorder %s19, 1
      %p121 = por %p119, %p120
      %p122 = scmp.ne.s32.totalorder %s113, %s114
      %p123 = scmp.eq.s32.totalorder %s19, 0
      %p124 = por %p122, %p123
      %p125 = scmp.ne.s32.totalorder %s113, %s114
      %p126 = scmp.eq.s32.totalorder %s20, 1
      %p127 = por %p125, %p126
      %p129 = scmp.ne.s32.totalorder %s114, %s128
      %p130 = scmp.eq.s32.totalorder %s20, 0
      %p131 = por %p129, %p130
      %s132 = ssub.s32 %s14, %s21
      %p133 = scmp.eq.s32.totalorder %s132, 0
      %s135 = sadd.s32 %s134, 1
      %s136 = scalar_select %p133, %s134, %s135
      %p139 = pneg %p133
      %p140 = scmp.eq.s32.totalorder %s14, 1
      %p141 = por %p139, %p140
      %p142 = scmp.ne.s32.totalorder %s134, %s137
      %p143 = scmp.eq.s32.totalorder %s14, 0
      %p144 = por %p142, %p143
      %p145 = scmp.ne.s32.totalorder %s134, %s137
      %p146 = scmp.eq.s32.totalorder %s19, 1
      %p147 = por %p145, %p146
      %p148 = scmp.ne.s32.totalorder %s137, %s138
      %p149 = scmp.eq.s32.totalorder %s19, 0
      %p150 = por %p148, %p149
      %p151 = scmp.ne.s32.totalorder %s137, %s138
      %p152 = scmp.eq.s32.totalorder %s20, 1
      %p153 = por %p151, %p152
      %p155 = scmp.ne.s32.totalorder %s138, %s154
      %p156 = scmp.eq.s32.totalorder %s20, 0
      %p157 = por %p155, %p156
      %p158 = scmp.le.s32.totalorder 1, %s14
      %p159 = scmp.lt.s32.totalorder %s14, 3
      %p160 = pnand %p158, %p159
      %p161 = pneg %p160
      // Predicated region
      $region9: #{tpu_custom_call.1} parent=5 // pred_check
        _
      $region10: #{tpu_custom_call.1} parent=5 // pred_check_branch
        %163 = sbr.rel (%p160) target = $region12
      $region11: #{tpu_custom_call.1} parent=5 // pred_region
        %s164 = ssub.s32 %s14, 1
        // Predicated region
        $region13: #{tpu_custom_call.1} parent=11 // pred_check
          %p165 = pneg %p61
        $region14: #{tpu_custom_call.1} parent=11 // pred_check_branch
          %167 = sbr.rel (%p165) target = $region16
        $region15: #{tpu_custom_call.1} parent=11 // pred_region
          _
        $region16: #{tpu_custom_call.1} parent=11 // pred_fallthru
          _
        // Predicated region
        $region17: #{tpu_custom_call.1} parent=11 // pred_check
          %p168 = pneg %p82
        $region18: #{tpu_custom_call.1} parent=11 // pred_check_branch
          %170 = sbr.rel (%p168) target = $region20
        $region19: #{tpu_custom_call.1} parent=11 // pred_region
          _
        $region20: #{tpu_custom_call.1} parent=11 // pred_fallthru
          _
        // Predicated region
        $region21: #{tpu_custom_call.1} parent=11 // pred_check
          %p171 = pneg %p103
        $region22: #{tpu_custom_call.1} parent=11 // pred_check_branch
          %173 = sbr.rel (%p171) target = $region24
        $region23: #{tpu_custom_call.1} parent=11 // pred_region
          _
        $region24: #{tpu_custom_call.1} parent=11 // pred_fallthru
          _
        // Predicated region
        $region25: #{tpu_custom_call.1} parent=11 // pred_check
          %p174 = pneg %p124
        $region26: #{tpu_custom_call.1} parent=11 // pred_check_branch
          %176 = sbr.rel (%p174) target = $region28
        $region27: #{tpu_custom_call.1} parent=11 // pred_region
          _
        $region28: #{tpu_custom_call.1} parent=11 // pred_fallthru
          _
      $region12: #{tpu_custom_call.1} parent=5 // pred_fallthru
        _
      %p177 = scmp.lt.s32.totalorder %s14, 2
      // Predicated region
      $region29: #{tpu_custom_call.1} parent=5 // pred_check
        %p178 = pneg %p177
      $region30: #{tpu_custom_call.1} parent=5 // pred_check_branch
        %180 = sbr.rel (%p178) target = $region32
      $region31: #{tpu_custom_call.1} parent=5 // pred_region
        // Predicated region
        $region33: #{tpu_custom_call.1} parent=31 // pred_check
          %p181 = pneg %p34
        $region34: #{tpu_custom_call.1} parent=31 // pred_check_branch
          %183 = sbr.rel (%p181) target = $region36
        $region35: #{tpu_custom_call.1} parent=31 // pred_region
          %p184 = scmp.lt.s32.totalorder %s14, 1
          %s185 = scalar_select %p184, %s14, 1
          %s186 = smul.addr %s185, 8
          %s187 = scalar_lea.vmem %s0, %s186
        $region36: #{tpu_custom_call.1} parent=31 // pred_fallthru
          _
      $region32: #{tpu_custom_call.1} parent=5 // pred_fallthru
        _
      %p188 = scmp.le.s32.totalorder 1, %s14
      %p189 = scmp.lt.s32.totalorder %s14, 3
      %p190 = pnand %p188, %p189
      %p191 = pneg %p190
      // Predicated region
      $region37: #{tpu_custom_call.1} parent=5 // pred_check
        _
      $region38: #{tpu_custom_call.1} parent=5 // pred_check_branch
        %193 = sbr.rel (%p190) target = $region40
      $region39: #{tpu_custom_call.1} parent=5 // pred_region
        %s194 = ssub.s32 %s14, 1
        %p195 = scmp.lt.s32.totalorder %s19, 1
        %s196 = scalar_select %p195, %s19, 1
        %s197 = smul.addr %s196, 8
        %s198 = scalar_lea.vmem %s0, %s197
        %p199 = pneg %p40
        %p200 = pneg %p37
        %p201 = pneg %p61
        %p202 = pneg %p58
        %p203 = pneg %p82
        %p204 = pneg %p79
        %p205 = pneg %p103
        %p206 = pneg %p100
        %p207 = pneg %p124
        %p208 = pneg %p121
        %p209 = pneg %p150
        %p210 = pneg %p147
        %s211 = sand.u32 %s137, 1
        %s212 = scalar_lea.sflag [#allocation3], %s211
        %s213 = sand.u32 %s137, 1
        %s214 = smul.addr %s213, 8
        %s215 = scalar_lea.vmem [#allocation2], %s214
        %p216 = scmp.lt.s32.totalorder %s19, 1
        %s217 = scalar_select %p216, %s19, 1
        %s218 = smul.addr %s217, 8
        %s219 = scalar_lea.vmem %s0, %s218
        %v220 = vld [vmem:[%s219] sm:$0xff]
        %v221 = vld [vmem:[%s1] sm:$0xff]
        %v222 = vld [vmem:[%s1 + $0x8] sm:$0xff]
        %v223 = vld [vmem:[%s1 + $0x10] sm:$0xff]
        %v224 = vld [vmem:[%s1 + $0x18] sm:$0xff]
        %v225 = vld [vmem:[%s2] sm:$0x1]
        %v227 = vperm.slane %v225, 0
        %vm229 = vcmask 261120
        %v231 = vsel %vm229, %v220, 0
        %233 = vmatpush.msra.mxu0 0.0
        %234 = vmatpush.msra.mxu0 0.0
        %235 = vmatpush.msra.mxu0 0.0
        %236 = vmatpush.msra.mxu0 0.0
        %237 = vmatpush.msra.mxu0 0.0
        %238 = vmatpush.msra.mxu0 0.0
        %239 = vmatpush.msra.mxu0 0.0
        %240 = vmatpush.msra.mxu0 0.0
        %241 = vmatpush.msra.mxu0 0.0
        %242 = vmatpush.msra.mxu0 0.0
        %243 = vmatpush.msra.mxu0 0.0
        %244 = vmatpush.msra.mxu0 0.0
        %245 = vmatpush.msra.mxu0 %v224
        %246 = vmatpush.msra.mxu0 %v223
        %247 = vmatpush.msra.mxu0 %v222
        %248 = vmatpush.msra.mxu0 %v221
        %249 = vmatmul.f32.gmra.mxu0 %v231
        %v250 = vpop.f32.mrf.mxu0
        %v251 = vadd.f32 %v227, %v250
        %252 = vdwg.mxu0
        %v253 = vmax.f32 %v251, 0.0
        %v254 = vld [vmem:[%s3] sm:$0xff]
        %v255 = vld [vmem:[%s3 + $0x8] sm:$0xff]
        %v256 = vld [vmem:[%s3 + $0x10] sm:$0xff]
        %v257 = vld [vmem:[%s3 + $0x18] sm:$0xff]
        %v258 = vld [vmem:[%s3 + $0x20] sm:$0xff]
        %v259 = vld [vmem:[%s3 + $0x28] sm:$0xff]
        %v260 = vld [vmem:[%s3 + $0x30] sm:$0xff]
        %v261 = vld [vmem:[%s3 + $0x38] sm:$0xff]
        %v262 = vld [vmem:[%s3 + $0x40] sm:$0xff]
        %v263 = vld [vmem:[%s3 + $0x48] sm:$0xff]
        %v264 = vld [vmem:[%s3 + $0x50] sm:$0xff]
        %v265 = vld [vmem:[%s3 + $0x58] sm:$0xff]
        %v266 = vld [vmem:[%s3 + $0x60] sm:$0xff]
        %v267 = vld [vmem:[%s3 + $0x68] sm:$0xff]
        %v268 = vld [vmem:[%s3 + $0x70] sm:$0xff]
        %v269 = vld [vmem:[%s3 + $0x78] sm:$0xff]
        %v270 = vld [vmem:[%s4] sm:$0x1]
        %v272 = vperm.slane %v270, 0
        %274 = vmatpush.msra.mxu0 %v269
        %275 = vmatpush.msra.mxu0 %v268
        %276 = vmatpush.msra.mxu0 %v267
        %277 = vmatpush.msra.mxu0 %v266
        %278 = vmatpush.msra.mxu0 %v265
        %279 = vmatpush.msra.mxu0 %v264
        %280 = vmatpush.msra.mxu0 %v263
        %281 = vmatpush.msra.mxu0 %v262
        %282 = vmatpush.msra.mxu0 %v261
        %283 = vmatpush.msra.mxu0 %v260
        %284 = vmatpush.msra.mxu0 %v259
        %285 = vmatpush.msra.mxu0 %v258
        %286 = vmatpush.msra.mxu0 %v257
        %287 = vmatpush.msra.mxu0 %v256
        %288 = vmatpush.msra.mxu0 %v255
        %289 = vmatpush.msra.mxu0 %v254
        %290 = vmatmul.f32.gmra.mxu0 %v253
        %v291 = vpop.f32.mrf.mxu0
        %v292 = vadd.f32 %v272, %v291
        %293 = vdwg.mxu0
        %294 = vst.msk [vmem:[%s215] sm:$0xff] %vm229, %v292
        %s295 = sand.u32 %s137, 1
        %s296 = scalar_lea.sflag [#allocation3], %s295
        %s297 = sand.u32 %s137, 1
        %s298 = smul.addr %s297, 8
        %s299 = scalar_lea.vmem [#allocation2], %s298
        // Predicated region
        $region41: #{tpu_custom_call.1} parent=39 // pred_check
          %p300 = pneg %p147
        $region42: #{tpu_custom_call.1} parent=39 // pred_check_branch
          %302 = sbr.rel (%p300) target = $region44
        $region43: #{tpu_custom_call.1} parent=39 // pred_region
          %304 = vsyncadd %s296, 0
          %s305 = smul.addr %s19, 8
          %s306 = scalar_lea.hbm %s5, %s305
          %s308 = sshll.u32 %s299, 4
          %s309 = int_to_ptr.vmem [resolvable:$true] %s308
          %s310 = sshll.u32 %s306, 4
          %s311 = int_to_ptr.hbm [resolvable:$true] %s310
          %313 = dma.vmem_to_hbm [thread:$0]  %s309, 128, %s311, %s296
        $region44: #{tpu_custom_call.1} parent=39 // pred_fallthru
          _
      $region40: #{tpu_custom_call.1} parent=5 // pred_fallthru
        _
      %p314 = scmp.le.s32.totalorder 2, %s14
      // Predicated region
      $region45: #{tpu_custom_call.1} parent=5 // pred_check
        %p315 = pneg %p314
      $region46: #{tpu_custom_call.1} parent=5 // pred_check_branch
        %317 = sbr.rel (%p315) target = $region48
      $region47: #{tpu_custom_call.1} parent=5 // pred_region
        %s318 = ssub.s32 %s14, 2
        // Predicated region
        $region49: #{tpu_custom_call.1} parent=47 // pred_check
          %p319 = pneg %p153
        $region50: #{tpu_custom_call.1} parent=47 // pred_check_branch
          %321 = sbr.rel (%p319) target = $region52
        $region51: #{tpu_custom_call.1} parent=47 // pred_region
          %s322 = sand.u32 %s138, 1
          %s323 = scalar_lea.sflag [#allocation3], %s322
          %s324 = sand.u32 %s138, 1
          %s325 = smul.addr %s324, 8
          %s326 = scalar_lea.vmem [#allocation2], %s325
          %328 = dma.done %s323, 128
        $region52: #{tpu_custom_call.1} parent=47 // pred_fallthru
          _
      $region48: #{tpu_custom_call.1} parent=5 // pred_fallthru
        _
    $region6: #{tpu_custom_call.1} parent=1 // loop_footer
      %s18 = sadd.s32 1, %s14
    $region7: #{tpu_custom_call.1} parent=1 // loop_footer_branch
      %13 = sbr.rel target = $region3
    $region8: #{tpu_custom_call.1} parent=1 // loop_exit
      _
    %329 = vsyncpa [#allocation3], 1
    %s330 = scalar_lea.sflag [#allocation3], 1
    %331 = vsyncpa %s330, 1

</llo_original>
